<compile_context>
chip_gen: v5e
topology: v5e:2x2
jax: 0.10.0
libtpu: 0.0.40
codegen_flags: <defaults>
</compile_context>

<pallas_src>
import functools

import numpy as np
import jax
import jax.numpy as jnp
from jax.experimental import pallas as pl
from jax.experimental.pallas import tpu as pltpu

SIZES = (2, 3)      # PSPModule default (dimension=2 path of the module)
LANE = 128
_MIB = 1024 * 1024


def _round_up(x: int, m: int) -> int:
    return -(-x // m) * m


def _cdiv(a: int, b: int) -> int:
    return -(-a // b)


@functools.lru_cache(maxsize=None)
def _build_pool_tensor(h: int, w: int, sizes, p_pad: int) -> np.ndarray:
    """(H, W, P_pad) f32 tensor reproducing AdaptiveAvgPool2d for each size,
    flattened & concatenated; columns >= P are zero lane-padding."""
    m = np.zeros((h, w, p_pad), dtype=np.float32)
    p = 0
    for s in sizes:
        for oi in range(s):
            r0 = (oi * h) // s
            r1 = _cdiv((oi + 1) * h, s)
            for oj in range(s):
                c0 = (oj * w) // s
                c1 = _cdiv((oj + 1) * w, s)
                m[r0:r1, c0:c1, p] = 1.0 / ((r1 - r0) * (c1 - c0))
                p += 1
    return m


def _plan_tiles(nc: int, h: int, w: int, p_pad: int, x_itemsize: int):
    """Pick tile_rows (multiple of 8) + vmem limit from *padded* VMEM
    footprints and the device's actual VMEM capacity (generation-aware)."""
    # Mosaic pads a block's last two dims to (8, 128) tiles in VMEM.
    x_row = _round_up(h, 8) * _round_up(w, LANE) * x_itemsize   # per-row x bytes
    out_row = p_pad * x_itemsize                                # per-row out bytes
    acc_row = p_pad * 4                                         # f32 accumulator
    w_bytes = h * _round_up(w, 8) * p_pad * 4                   # pool tensor (f32)

    try:
        cap = int(pltpu.get_tpu_info().vmem_capacity_bytes)     # 64 MiB v7x, 128 MiB v5e/v6e
    except Exception:
        cap = 64 * _MIB                                         # conservative fallback
    budget = min(cap - 16 * _MIB, int(cap * 0.70))

    per_row = 2 * x_row + 2 * out_row + acc_row                 # double-buffered in/out
    avail = budget - 2 * w_bytes
    if avail < 8 * per_row:
        raise ValueError(
            f"PSP Pallas kernel: spatial size {h}x{w} needs more VMEM than available "
            f"(pool tensor {2 * w_bytes} B + minimum tile {8 * per_row} B exceeds "
            f"budget {budget} B of capacity {cap} B).")

    t_budget = (avail // per_row) // 8 * 8
    # Keep >= ~4 grid steps when possible so the 'parallel' axis can be split
    # across v7x's two TensorCores (each with its own HBM DMA path).
    t_cap = max(8, _round_up(_cdiv(nc, 4), 8))
    tile_rows = max(8, min(t_budget, t_cap))

    need = 2 * w_bytes + tile_rows * per_row + 4 * _MIB
    vmem_limit = int(min(cap, max(need, 32 * _MIB)))
    return tile_rows, vmem_limit


def _psp_kernel(x_ref, w_ref, o_ref):
    # x_ref: (T, H, W)   w_ref: (H, W, P_pad)   o_ref: (T, P_pad)
    # Contract (H, W) with H small 2-D MXU matmuls (no in-kernel reshape),
    # accumulating in f32.  bf16 inputs are promoted to f32 by jnp.dot since
    # the weights are f32.
    h = x_ref.shape[1]
    acc = jnp.dot(x_ref[:, 0, :], w_ref[0], preferred_element_type=jnp.float32)
    for i in range(1, h):   # static unroll; H is small for PSP feature maps
        acc = acc + jnp.dot(x_ref[:, i, :], w_ref[i],
                            preferred_element_type=jnp.float32)
    o_ref[...] = acc.astype(o_ref.dtype)


@functools.partial(jax.jit, static_argnames=("sizes",))
def psp_module(feats: jax.Array, sizes=SIZES) -> jax.Array:
    """feats: (N, C, H, W) -> (N, C, sum(s*s for s in sizes))."""
    n, c, h, w = feats.shape
    sizes = tuple(sizes)
    p = sum(s * s for s in sizes)
    p_pad = max(LANE, _round_up(p, LANE))
    nc = n * c
    itemsize = jnp.dtype(feats.dtype).itemsize

    # Layout-free: only leading dims merge, trailing (H, W) untouched -> no
    # HBM relayout (unlike the old (NC, H*W) reshape).
    x3 = feats.reshape(nc, h, w)

    # Baked in as a jit constant; kept f32 regardless of input dtype.
    pool_w = jnp.asarray(_build_pool_tensor(h, w, sizes, p_pad))

    tile_rows, vmem_limit = _plan_tiles(nc, h, w, p_pad, itemsize)
    grid = (_cdiv(nc, tile_rows),)   # partial edge block is masked by Pallas

    cost = pl.CostEstimate(
        flops=2 * nc * h * w * p_pad,
        transcendentals=0,
        bytes_accessed=(nc * h * w * itemsize
                        + h * w * p_pad * 4
                        + nc * p_pad * itemsize),
    )

    out2d = pl.pallas_call(
        _psp_kernel,
        out_shape=jax.ShapeDtypeStruct((nc, p_pad), feats.dtype),
        grid_spec=pltpu.PrefetchScalarGridSpec(
            num_scalar_prefetch=0,
            grid=grid,
            in_specs=[
                pl.BlockSpec((tile_rows, h, w), lambda i: (i, 0, 0)),
                # Constant block index -> the pool tensor is not re-DMA'd
                # every grid step (it stays resident in VMEM).
                pl.BlockSpec((h, w, p_pad), lambda i: (0, 0, 0)),
            ],
            out_specs=pl.BlockSpec((tile_rows, p_pad), lambda i: (i, 0)),
        ),
        compiler_params=pltpu.CompilerParams(
            dimension_semantics=("parallel",),
            vmem_limit_bytes=vmem_limit,
        ),
        cost_estimate=cost,
    )(x3, pool_w)

    return out2d[:, :p].reshape(n, c, p)


def _reference_psp(feats: jnp.ndarray, sizes=SIZES) -> jnp.ndarray:
    """Pure-JAX reference of the PyTorch forward (sanity check)."""
    n, c, h, w = feats.shape
    outs = []
    for s in sizes:
        vals = []
        for oi in range(s):
            r0 = (oi * h) // s
            r1 = _cdiv((oi + 1) * h, s)
            for oj in range(s):
                c0 = (oj * w) // s
                c1 = _cdiv((oj + 1) * w, s)
                vals.append(jnp.mean(feats[:, :, r0:r1, c0:c1], axis=(2, 3)))
        outs.append(jnp.stack(vals, axis=-1))   # (n, c, s*s)
    return jnp.concatenate(outs, axis=-1)


if __name__ == "__main__":
    key = jax.random.PRNGKey(0)
    feats = jax.random.normal(key, (2, 4, 16, 16), dtype=jnp.float32)

    out = jax.block_until_ready(psp_module(feats))

    ref = _reference_psp(feats)
    assert out.shape == (2, 4, 13), out.shape
    np.testing.assert_allclose(np.asarray(out), np.asarray(ref),
                               rtol=1e-5, atol=1e-5)
    print("KERNEL_OK")
</pallas_src>

<mosaic_0001>
module attributes {stable_mosaic.version = 11 : i64} {
  func.func @_psp_kernel(%arg0: i32, %arg1: memref<8x16x16xf32, #tpu.memory_space<vmem>>, %arg2: memref<16x16x128xf32, #tpu.memory_space<vmem>>, %arg3: memref<8x128xf32, #tpu.memory_space<vmem>>) attributes {dimension_semantics = [#tpu.dimension_semantics<parallel>], iteration_bounds = array<i64: 1>, scalar_prefetch = 0 : i64, scratch_operands = 0 : i64, tpu.core_type = #tpu.core_type<tc>, window_params = [{transform_indices = @transform_0, window_bounds = array<i64: 8, 16, 16>}, {pipeline_mode = #tpu.pipeline_mode<synchronous>, transform_indices = @transform_1, window_bounds = array<i64: 16, 16, 128>}, {transform_indices = @transform_2, window_bounds = array<i64: 8, 128>}]} {
    %c0 = arith.constant 0 : index
    %c0_0 = arith.constant 0 : index
    %c0_1 = arith.constant 0 : index
    %0 = vector.load %arg1[%c0, %c0_0, %c0_1] : memref<8x16x16xf32, #tpu.memory_space<vmem>>, vector<8x1x16xf32>
    %1 = vector.shape_cast %0 : vector<8x1x16xf32> to vector<8x16xf32>
    %c0_2 = arith.constant 0 : index
    %c0_3 = arith.constant 0 : index
    %c0_4 = arith.constant 0 : index
    %2 = vector.load %arg2[%c0_2, %c0_3, %c0_4] : memref<16x16x128xf32, #tpu.memory_space<vmem>>, vector<1x16x128xf32>
    %3 = vector.shape_cast %2 : vector<1x16x128xf32> to vector<16x128xf32>
    %cst = arith.constant dense<0.000000e+00> : vector<8x128xf32>
    %4 = tpu.matmul %1, %3, %cst {dimension_numbers = #tpu.dot_dimension_numbers<[1], [0], [0], [1], [0, 0, 1, 1], [], []>} : vector<8x16xf32>, vector<16x128xf32>, vector<8x128xf32> -> vector<8x128xf32>
    %c0_5 = arith.constant 0 : index
    %c1 = arith.constant 1 : index
    %c0_6 = arith.constant 0 : index
    %5 = vector.load %arg1[%c0_5, %c1, %c0_6] : memref<8x16x16xf32, #tpu.memory_space<vmem>>, vector<8x1x16xf32>
    %6 = vector.shape_cast %5 : vector<8x1x16xf32> to vector<8x16xf32>
    %c1_7 = arith.constant 1 : index
    %c0_8 = arith.constant 0 : index
    %c0_9 = arith.constant 0 : index
    %7 = vector.load %arg2[%c1_7, %c0_8, %c0_9] : memref<16x16x128xf32, #tpu.memory_space<vmem>>, vector<1x16x128xf32>
    %8 = vector.shape_cast %7 : vector<1x16x128xf32> to vector<16x128xf32>
    %cst_10 = arith.constant dense<0.000000e+00> : vector<8x128xf32>
    %9 = tpu.matmul %6, %8, %cst_10 {dimension_numbers = #tpu.dot_dimension_numbers<[1], [0], [0], [1], [0, 0, 1, 1], [], []>} : vector<8x16xf32>, vector<16x128xf32>, vector<8x128xf32> -> vector<8x128xf32>
    %10 = arith.addf %4, %9 : vector<8x128xf32>
    %c0_11 = arith.constant 0 : index
    %c2 = arith.constant 2 : index
    %c0_12 = arith.constant 0 : index
    %11 = vector.load %arg1[%c0_11, %c2, %c0_12] : memref<8x16x16xf32, #tpu.memory_space<vmem>>, vector<8x1x16xf32>
    %12 = vector.shape_cast %11 : vector<8x1x16xf32> to vector<8x16xf32>
    %c2_13 = arith.constant 2 : index
    %c0_14 = arith.constant 0 : index
    %c0_15 = arith.constant 0 : index
    %13 = vector.load %arg2[%c2_13, %c0_14, %c0_15] : memref<16x16x128xf32, #tpu.memory_space<vmem>>, vector<1x16x128xf32>
    %14 = vector.shape_cast %13 : vector<1x16x128xf32> to vector<16x128xf32>
    %cst_16 = arith.constant dense<0.000000e+00> : vector<8x128xf32>
    %15 = tpu.matmul %12, %14, %cst_16 {dimension_numbers = #tpu.dot_dimension_numbers<[1], [0], [0], [1], [0, 0, 1, 1], [], []>} : vector<8x16xf32>, vector<16x128xf32>, vector<8x128xf32> -> vector<8x128xf32>
    %16 = arith.addf %10, %15 : vector<8x128xf32>
    %c0_17 = arith.constant 0 : index
    %c3 = arith.constant 3 : index
    %c0_18 = arith.constant 0 : index
    %17 = vector.load %arg1[%c0_17, %c3, %c0_18] : memref<8x16x16xf32, #tpu.memory_space<vmem>>, vector<8x1x16xf32>
    %18 = vector.shape_cast %17 : vector<8x1x16xf32> to vector<8x16xf32>
    %c3_19 = arith.constant 3 : index
    %c0_20 = arith.constant 0 : index
    %c0_21 = arith.constant 0 : index
    %19 = vector.load %arg2[%c3_19, %c0_20, %c0_21] : memref<16x16x128xf32, #tpu.memory_space<vmem>>, vector<1x16x128xf32>
    %20 = vector.shape_cast %19 : vector<1x16x128xf32> to vector<16x128xf32>
    %cst_22 = arith.constant dense<0.000000e+00> : vector<8x128xf32>
    %21 = tpu.matmul %18, %20, %cst_22 {dimension_numbers = #tpu.dot_dimension_numbers<[1], [0], [0], [1], [0, 0, 1, 1], [], []>} : vector<8x16xf32>, vector<16x128xf32>, vector<8x128xf32> -> vector<8x128xf32>
    %22 = arith.addf %16, %21 : vector<8x128xf32>
    %c0_23 = arith.constant 0 : index
    %c4 = arith.constant 4 : index
    %c0_24 = arith.constant 0 : index
    %23 = vector.load %arg1[%c0_23, %c4, %c0_24] : memref<8x16x16xf32, #tpu.memory_space<vmem>>, vector<8x1x16xf32>
    %24 = vector.shape_cast %23 : vector<8x1x16xf32> to vector<8x16xf32>
    %c4_25 = arith.constant 4 : index
    %c0_26 = arith.constant 0 : index
    %c0_27 = arith.constant 0 : index
    %25 = vector.load %arg2[%c4_25, %c0_26, %c0_27] : memref<16x16x128xf32, #tpu.memory_space<vmem>>, vector<1x16x128xf32>
    %26 = vector.shape_cast %25 : vector<1x16x128xf32> to vector<16x128xf32>
    %cst_28 = arith.constant dense<0.000000e+00> : vector<8x128xf32>
    %27 = tpu.matmul %24, %26, %cst_28 {dimension_numbers = #tpu.dot_dimension_numbers<[1], [0], [0], [1], [0, 0, 1, 1], [], []>} : vector<8x16xf32>, vector<16x128xf32>, vector<8x128xf32> -> vector<8x128xf32>
    %28 = arith.addf %22, %27 : vector<8x128xf32>
    %c0_29 = arith.constant 0 : index
    %c5 = arith.constant 5 : index
    %c0_30 = arith.constant 0 : index
    %29 = vector.load %arg1[%c0_29, %c5, %c0_30] : memref<8x16x16xf32, #tpu.memory_space<vmem>>, vector<8x1x16xf32>
    %30 = vector.shape_cast %29 : vector<8x1x16xf32> to vector<8x16xf32>
    %c5_31 = arith.constant 5 : index
    %c0_32 = arith.constant 0 : index
    %c0_33 = arith.constant 0 : index
    %31 = vector.load %arg2[%c5_31, %c0_32, %c0_33] : memref<16x16x128xf32, #tpu.memory_space<vmem>>, vector<1x16x128xf32>
    %32 = vector.shape_cast %31 : vector<1x16x128xf32> to vector<16x128xf32>
    %cst_34 = arith.constant dense<0.000000e+00> : vector<8x128xf32>
    %33 = tpu.matmul %30, %32, %cst_34 {dimension_numbers = #tpu.dot_dimension_numbers<[1], [0], [0], [1], [0, 0, 1, 1], [], []>} : vector<8x16xf32>, vector<16x128xf32>, vector<8x128xf32> -> vector<8x128xf32>
    %34 = arith.addf %28, %33 : vector<8x128xf32>
    %c0_35 = arith.constant 0 : index
    %c6 = arith.constant 6 : index
    %c0_36 = arith.constant 0 : index
    %35 = vector.load %arg1[%c0_35, %c6, %c0_36] : memref<8x16x16xf32, #tpu.memory_space<vmem>>, vector<8x1x16xf32>
    %36 = vector.shape_cast %35 : vector<8x1x16xf32> to vector<8x16xf32>
    %c6_37 = arith.constant 6 : index
    %c0_38 = arith.constant 0 : index
    %c0_39 = arith.constant 0 : index
    %37 = vector.load %arg2[%c6_37, %c0_38, %c0_39] : memref<16x16x128xf32, #tpu.memory_space<vmem>>, vector<1x16x128xf32>
    %38 = vector.shape_cast %37 : vector<1x16x128xf32> to vector<16x128xf32>
    %cst_40 = arith.constant dense<0.000000e+00> : vector<8x128xf32>
    %39 = tpu.matmul %36, %38, %cst_40 {dimension_numbers = #tpu.dot_dimension_numbers<[1], [0], [0], [1], [0, 0, 1, 1], [], []>} : vector<8x16xf32>, vector<16x128xf32>, vector<8x128xf32> -> vector<8x128xf32>
    %40 = arith.addf %34, %39 : vector<8x128xf32>
    %c0_41 = arith.constant 0 : index
    %c7 = arith.constant 7 : index
    %c0_42 = arith.constant 0 : index
    %41 = vector.load %arg1[%c0_41, %c7, %c0_42] : memref<8x16x16xf32, #tpu.memory_space<vmem>>, vector<8x1x16xf32>
    %42 = vector.shape_cast %41 : vector<8x1x16xf32> to vector<8x16xf32>
    %c7_43 = arith.constant 7 : index
    %c0_44 = arith.constant 0 : index
    %c0_45 = arith.constant 0 : index
    %43 = vector.load %arg2[%c7_43, %c0_44, %c0_45] : memref<16x16x128xf32, #tpu.memory_space<vmem>>, vector<1x16x128xf32>
    %44 = vector.shape_cast %43 : vector<1x16x128xf32> to vector<16x128xf32>
    %cst_46 = arith.constant dense<0.000000e+00> : vector<8x128xf32>
    %45 = tpu.matmul %42, %44, %cst_46 {dimension_numbers = #tpu.dot_dimension_numbers<[1], [0], [0], [1], [0, 0, 1, 1], [], []>} : vector<8x16xf32>, vector<16x128xf32>, vector<8x128xf32> -> vector<8x128xf32>
    %46 = arith.addf %40, %45 : vector<8x128xf32>
    %c0_47 = arith.constant 0 : index
    %c8 = arith.constant 8 : index
    %c0_48 = arith.constant 0 : index
    %47 = vector.load %arg1[%c0_47, %c8, %c0_48] : memref<8x16x16xf32, #tpu.memory_space<vmem>>, vector<8x1x16xf32>
    %48 = vector.shape_cast %47 : vector<8x1x16xf32> to vector<8x16xf32>
    %c8_49 = arith.constant 8 : index
    %c0_50 = arith.constant 0 : index
    %c0_51 = arith.constant 0 : index
    %49 = vector.load %arg2[%c8_49, %c0_50, %c0_51] : memref<16x16x128xf32, #tpu.memory_space<vmem>>, vector<1x16x128xf32>
    %50 = vector.shape_cast %49 : vector<1x16x128xf32> to vector<16x128xf32>
    %cst_52 = arith.constant dense<0.000000e+00> : vector<8x128xf32>
    %51 = tpu.matmul %48, %50, %cst_52 {dimension_numbers = #tpu.dot_dimension_numbers<[1], [0], [0], [1], [0, 0, 1, 1], [], []>} : vector<8x16xf32>, vector<16x128xf32>, vector<8x128xf32> -> vector<8x128xf32>
    %52 = arith.addf %46, %51 : vector<8x128xf32>
    %c0_53 = arith.constant 0 : index
    %c9 = arith.constant 9 : index
    %c0_54 = arith.constant 0 : index
    %53 = vector.load %arg1[%c0_53, %c9, %c0_54] : memref<8x16x16xf32, #tpu.memory_space<vmem>>, vector<8x1x16xf32>
    %54 = vector.shape_cast %53 : vector<8x1x16xf32> to vector<8x16xf32>
    %c9_55 = arith.constant 9 : index
    %c0_56 = arith.constant 0 : index
    %c0_57 = arith.constant 0 : index
    %55 = vector.load %arg2[%c9_55, %c0_56, %c0_57] : memref<16x16x128xf32, #tpu.memory_space<vmem>>, vector<1x16x128xf32>
    %56 = vector.shape_cast %55 : vector<1x16x128xf32> to vector<16x128xf32>
    %cst_58 = arith.constant dense<0.000000e+00> : vector<8x128xf32>
    %57 = tpu.matmul %54, %56, %cst_58 {dimension_numbers = #tpu.dot_dimension_numbers<[1], [0], [0], [1], [0, 0, 1, 1], [], []>} : vector<8x16xf32>, vector<16x128xf32>, vector<8x128xf32> -> vector<8x128xf32>
    %58 = arith.addf %52, %57 : vector<8x128xf32>
    %c0_59 = arith.constant 0 : index
    %c10 = arith.constant 10 : index
    %c0_60 = arith.constant 0 : index
    %59 = vector.load %arg1[%c0_59, %c10, %c0_60] : memref<8x16x16xf32, #tpu.memory_space<vmem>>, vector<8x1x16xf32>
    %60 = vector.shape_cast %59 : vector<8x1x16xf32> to vector<8x16xf32>
    %c10_61 = arith.constant 10 : index
    %c0_62 = arith.constant 0 : index
    %c0_63 = arith.constant 0 : index
    %61 = vector.load %arg2[%c10_61, %c0_62, %c0_63] : memref<16x16x128xf32, #tpu.memory_space<vmem>>, vector<1x16x128xf32>
    %62 = vector.shape_cast %61 : vector<1x16x128xf32> to vector<16x128xf32>
    %cst_64 = arith.constant dense<0.000000e+00> : vector<8x128xf32>
    %63 = tpu.matmul %60, %62, %cst_64 {dimension_numbers = #tpu.dot_dimension_numbers<[1], [0], [0], [1], [0, 0, 1, 1], [], []>} : vector<8x16xf32>, vector<16x128xf32>, vector<8x128xf32> -> vector<8x128xf32>
    %64 = arith.addf %58, %63 : vector<8x128xf32>
    %c0_65 = arith.constant 0 : index
    %c11 = arith.constant 11 : index
    %c0_66 = arith.constant 0 : index
    %65 = vector.load %arg1[%c0_65, %c11, %c0_66] : memref<8x16x16xf32, #tpu.memory_space<vmem>>, vector<8x1x16xf32>
    %66 = vector.shape_cast %65 : vector<8x1x16xf32> to vector<8x16xf32>
    %c11_67 = arith.constant 11 : index
    %c0_68 = arith.constant 0 : index
    %c0_69 = arith.constant 0 : index
    %67 = vector.load %arg2[%c11_67, %c0_68, %c0_69] : memref<16x16x128xf32, #tpu.memory_space<vmem>>, vector<1x16x128xf32>
    %68 = vector.shape_cast %67 : vector<1x16x128xf32> to vector<16x128xf32>
    %cst_70 = arith.constant dense<0.000000e+00> : vector<8x128xf32>
    %69 = tpu.matmul %66, %68, %cst_70 {dimension_numbers = #tpu.dot_dimension_numbers<[1], [0], [0], [1], [0, 0, 1, 1], [], []>} : vector<8x16xf32>, vector<16x128xf32>, vector<8x128xf32> -> vector<8x128xf32>
    %70 = arith.addf %64, %69 : vector<8x128xf32>
    %c0_71 = arith.constant 0 : index
    %c12 = arith.constant 12 : index
    %c0_72 = arith.constant 0 : index
    %71 = vector.load %arg1[%c0_71, %c12, %c0_72] : memref<8x16x16xf32, #tpu.memory_space<vmem>>, vector<8x1x16xf32>
    %72 = vector.shape_cast %71 : vector<8x1x16xf32> to vector<8x16xf32>
    %c12_73 = arith.constant 12 : index
    %c0_74 = arith.constant 0 : index
    %c0_75 = arith.constant 0 : index
    %73 = vector.load %arg2[%c12_73, %c0_74, %c0_75] : memref<16x16x128xf32, #tpu.memory_space<vmem>>, vector<1x16x128xf32>
    %74 = vector.shape_cast %73 : vector<1x16x128xf32> to vector<16x128xf32>
    %cst_76 = arith.constant dense<0.000000e+00> : vector<8x128xf32>
    %75 = tpu.matmul %72, %74, %cst_76 {dimension_numbers = #tpu.dot_dimension_numbers<[1], [0], [0], [1], [0, 0, 1, 1], [], []>} : vector<8x16xf32>, vector<16x128xf32>, vector<8x128xf32> -> vector<8x128xf32>
    %76 = arith.addf %70, %75 : vector<8x128xf32>
    %c0_77 = arith.constant 0 : index
    %c13 = arith.constant 13 : index
    %c0_78 = arith.constant 0 : index
    %77 = vector.load %arg1[%c0_77, %c13, %c0_78] : memref<8x16x16xf32, #tpu.memory_space<vmem>>, vector<8x1x16xf32>
    %78 = vector.shape_cast %77 : vector<8x1x16xf32> to vector<8x16xf32>
    %c13_79 = arith.constant 13 : index
    %c0_80 = arith.constant 0 : index
    %c0_81 = arith.constant 0 : index
    %79 = vector.load %arg2[%c13_79, %c0_80, %c0_81] : memref<16x16x128xf32, #tpu.memory_space<vmem>>, vector<1x16x128xf32>
    %80 = vector.shape_cast %79 : vector<1x16x128xf32> to vector<16x128xf32>
    %cst_82 = arith.constant dense<0.000000e+00> : vector<8x128xf32>
    %81 = tpu.matmul %78, %80, %cst_82 {dimension_numbers = #tpu.dot_dimension_numbers<[1], [0], [0], [1], [0, 0, 1, 1], [], []>} : vector<8x16xf32>, vector<16x128xf32>, vector<8x128xf32> -> vector<8x128xf32>
    %82 = arith.addf %76, %81 : vector<8x128xf32>
    %c0_83 = arith.constant 0 : index
    %c14 = arith.constant 14 : index
    %c0_84 = arith.constant 0 : index
    %83 = vector.load %arg1[%c0_83, %c14, %c0_84] : memref<8x16x16xf32, #tpu.memory_space<vmem>>, vector<8x1x16xf32>
    %84 = vector.shape_cast %83 : vector<8x1x16xf32> to vector<8x16xf32>
    %c14_85 = arith.constant 14 : index
    %c0_86 = arith.constant 0 : index
    %c0_87 = arith.constant 0 : index
    %85 = vector.load %arg2[%c14_85, %c0_86, %c0_87] : memref<16x16x128xf32, #tpu.memory_space<vmem>>, vector<1x16x128xf32>
    %86 = vector.shape_cast %85 : vector<1x16x128xf32> to vector<16x128xf32>
    %cst_88 = arith.constant dense<0.000000e+00> : vector<8x128xf32>
    %87 = tpu.matmul %84, %86, %cst_88 {dimension_numbers = #tpu.dot_dimension_numbers<[1], [0], [0], [1], [0, 0, 1, 1], [], []>} : vector<8x16xf32>, vector<16x128xf32>, vector<8x128xf32> -> vector<8x128xf32>
    %88 = arith.addf %82, %87 : vector<8x128xf32>
    %c0_89 = arith.constant 0 : index
    %c15 = arith.constant 15 : index
    %c0_90 = arith.constant 0 : index
    %89 = vector.load %arg1[%c0_89, %c15, %c0_90] : memref<8x16x16xf32, #tpu.memory_space<vmem>>, vector<8x1x16xf32>
    %90 = vector.shape_cast %89 : vector<8x1x16xf32> to vector<8x16xf32>
    %c15_91 = arith.constant 15 : index
    %c0_92 = arith.constant 0 : index
    %c0_93 = arith.constant 0 : index
    %91 = vector.load %arg2[%c15_91, %c0_92, %c0_93] : memref<16x16x128xf32, #tpu.memory_space<vmem>>, vector<1x16x128xf32>
    %92 = vector.shape_cast %91 : vector<1x16x128xf32> to vector<16x128xf32>
    %cst_94 = arith.constant dense<0.000000e+00> : vector<8x128xf32>
    %93 = tpu.matmul %90, %92, %cst_94 {dimension_numbers = #tpu.dot_dimension_numbers<[1], [0], [0], [1], [0, 0, 1, 1], [], []>} : vector<8x16xf32>, vector<16x128xf32>, vector<8x128xf32> -> vector<8x128xf32>
    %94 = arith.addf %88, %93 : vector<8x128xf32>
    %c0_95 = arith.constant 0 : index
    %c0_96 = arith.constant 0 : index
    %95 = vector.load %arg3[%c0_95, %c0_96] : memref<8x128xf32, #tpu.memory_space<vmem>>, vector<8x128xf32>
    tpu.vector_store %arg3[%c0_95, %c0_96], %94 {strides = array<i32>} : memref<8x128xf32, #tpu.memory_space<vmem>>, vector<8x128xf32>,
    return
  }
  func.func @transform_0(%arg0: i32) -> (i32, i32, i32) {
    %c0_i32 = arith.constant 0 : i32
    %c0_i32_0 = arith.constant 0 : i32
    %c0_i32_1 = arith.constant 0 : i32
    return %arg0, %c0_i32, %c0_i32_0 : i32, i32, i32
  }
  func.func @transform_1(%arg0: i32) -> (i32, i32, i32) {
    %c0_i32 = arith.constant 0 : i32
    %c0_i32_0 = arith.constant 0 : i32
    %c0_i32_1 = arith.constant 0 : i32
    %c0_i32_2 = arith.constant 0 : i32
    return %c0_i32, %c0_i32_0, %c0_i32_1 : i32, i32, i32
  }
  func.func @transform_2(%arg0: i32) -> (i32, i32) {
    %c0_i32 = arith.constant 0 : i32
    %c0_i32_0 = arith.constant 0 : i32
    return %arg0, %c0_i32 : i32, i32
  }
}

</mosaic_0001>

<llo_original>
// kernel: psp_module.1
$region0: #{psp_module.1}
  #allocation0 [shape = 'u32[]', space=smem, size = 0x4, offset = 0x4, fixed_abs, tag = 'smem constant byte address 0x4 - core index']
  #allocation1 [shape = 'u32[72,128]{1,0:T(1,128)}', space=vmem, size = 0x9000, scoped, tag = 'internal scratch']
  %s0 = inlined_call_operand.hbm [shape: f32[8,16,16], index: 0, kind: input, shape index: {}]
  %s1 = inlined_call_operand.hbm [shape: f32[16,16,128], index: 1, kind: input, shape index: {}]
  %s2 = inlined_call_operand.hbm [shape: f32[8,128], index: 2, kind: output, shape index: {}]
  %s3 = sld [smem:[#allocation0]]
  $region26: #{psp_module.1} parent=0
    _
  %s5 = ssub.s32 1, %s3
  %s6 = scalar_select 0, %s5, %s3
  $region1: #{psp_module.1} parent=0
    #allocation2 [shape = 'u8[65536]{0}', space=vmem, size = 0x10000, scoped, tag = 'input window, operand 0, single buffered']
    #allocation3 [shape = 's32[1]{0}', space=sflag, size = 0x4, scoped, tag = 'scoped memory for psp_module.1']
    #allocation4 [shape = 's32[1]{0}', space=sflag, size = 0x4, scoped, tag = 'scoped memory for psp_module.1']
    #allocation5 [shape = 'u8[131072]{0}', space=vmem, size = 0x20000, scoped, tag = 'input window, operand 1, single buffered']
    #allocation6 [shape = 's32[1]{0}', space=sflag, size = 0x4, scoped, tag = 'scoped memory for psp_module.1']
    #allocation7 [shape = 'u8[4096]{0}', space=vmem, size = 0x1000, scoped, tag = 'output window, operand 0, single buffered']
    %7 = vsyncpa [#allocation3], 0
    %8 = vsyncpa [#allocation6], 0
    %9 = vsyncpa [#allocation4], 0
    // Predicated region
    $region2: #{psp_module.1} parent=1 // pred_check
      _
    $region3: #{psp_module.1} parent=1 // pred_check_branch
      %11 = sbr.rel (0) target = $region5
    $region4: #{psp_module.1} parent=1 // pred_region
      %13 = vsyncadd [#allocation3], 0
      %s14 = sshll.u32 %s0, 4
      %s15 = int_to_ptr.hbm [resolvable:$true] %s14
      %s16 = sshll.u32 [#allocation2], 4
      %s17 = int_to_ptr.vmem [resolvable:$true] %s16
      %22 = dma.hbm_to_vmem [thread:$0]  %s15, 2048, %s17, [#allocation3], 128, 128, 8
    $region5: #{psp_module.1} parent=1 // pred_fallthru
      _
    // Predicated region
    $region6: #{psp_module.1} parent=1 // pred_check
      _
    $region7: #{psp_module.1} parent=1 // pred_check_branch
      %24 = sbr.rel (0) target = $region9
    $region8: #{psp_module.1} parent=1 // pred_region
      %26 = vsyncadd [#allocation6], 0
      %s27 = sshll.u32 %s1, 4
      %s28 = int_to_ptr.hbm [resolvable:$true] %s27
      %s29 = sshll.u32 [#allocation5], 4
      %s30 = int_to_ptr.vmem [resolvable:$true] %s29
      %35 = dma.hbm_to_vmem [thread:$0]  %s28, 4096, %s30, [#allocation6], 128, 128, 8
    $region9: #{psp_module.1} parent=1 // pred_fallthru
      _
    // Predicated region
    $region10: #{psp_module.1} parent=1 // pred_check
      _
    $region11: #{psp_module.1} parent=1 // pred_check_branch
      %37 = sbr.rel (0) target = $region13
    $region12: #{psp_module.1} parent=1 // pred_region
      %39 = dma.done [#allocation3], 2048
    $region13: #{psp_module.1} parent=1 // pred_fallthru
      _
    // Predicated region
    $region14: #{psp_module.1} parent=1 // pred_check
      _
    $region15: #{psp_module.1} parent=1 // pred_check_branch
      %41 = sbr.rel (0) target = $region17
    $region16: #{psp_module.1} parent=1 // pred_region
      %43 = dma.done [#allocation6], 4096
    $region17: #{psp_module.1} parent=1 // pred_fallthru
      _
    %v44 = vld [vmem:[#allocation2] sm:$0x1]
    %v45 = vld [vmem:[#allocation2 + $0x10] sm:$0x1]
    %v46 = vld [vmem:[#allocation2 + $0x20] sm:$0x1]
    %v47 = vld [vmem:[#allocation2 + $0x30] sm:$0x1]
    %v48 = vld [vmem:[#allocation2 + $0x40] sm:$0x1]
    %v49 = vld [vmem:[#allocation2 + $0x50] sm:$0x1]
    %v50 = vld [vmem:[#allocation2 + $0x60] sm:$0x1]
    %v51 = vld [vmem:[#allocation2 + $0x70] sm:$0x1]
    %v52 = vld [vmem:[#allocation5] sm:$0xff]
    %v53 = vld [vmem:[#allocation5 + $0x8] sm:$0xff]
    %v54 = vld [vmem:[#allocation2 + $0x1] sm:$0x1]
    %v55 = vld [vmem:[#allocation2 + $0x11] sm:$0x1]
    %v56 = vld [vmem:[#allocation2 + $0x21] sm:$0x1]
    %v57 = vld [vmem:[#allocation2 + $0x31] sm:$0x1]
    %v58 = vld [vmem:[#allocation2 + $0x41] sm:$0x1]
    %v59 = vld [vmem:[#allocation2 + $0x51] sm:$0x1]
    %v60 = vld [vmem:[#allocation2 + $0x61] sm:$0x1]
    %v61 = vld [vmem:[#allocation2 + $0x71] sm:$0x1]
    %s62 = scalar_lea.vmem [#allocation5], 16
    %v63 = vld [vmem:[%s62] sm:$0xff]
    %v64 = vld [vmem:[%s62 + $0x8] sm:$0xff]
    %v73 = vrot.slane %v55, 7
    %vm74 = vcmask 1041409
    %v75 = vsel %vm74, %v73, %v54
    %v76 = vrot.slane %v56, 6
    %vm77 = vcmask 1042434
    %v78 = vsel %vm77, %v76, %v75
    %v79 = vrot.slane %v57, 5
    %vm80 = vcmask 1043459
    %v81 = vsel %vm80, %v79, %v78
    %v82 = vrot.slane %v58, 4
    %vm83 = vcmask 1044484
    %v84 = vsel %vm83, %v82, %v81
    %v85 = vrot.slane %v59, 3
    %vm86 = vcmask 1045509
    %v87 = vsel %vm86, %v85, %v84
    %v88 = vrot.slane %v60, 2
    %vm89 = vcmask 1046534
    %v90 = vsel %vm89, %v88, %v87
    %v91 = vrot.slane %v61, 1
    %vm92 = vcmask 1047559
    %v93 = vsel %vm92, %v91, %v90
    %vm94 = vcmask 130048
    %v95 = vsel %vm94, %v93, 0
    %97 = vmatpush.msra.mxu0 0.0
    %98 = vmatpush.msra.mxu0 0.0
    %99 = vmatpush.msra.mxu0 0.0
    %100 = vmatpush.msra.mxu0 0.0
    %101 = vmatpush.msra.mxu0 0.0
    %102 = vmatpush.msra.mxu0 0.0
    %103 = vmatpush.msra.mxu0 0.0
    %104 = vmatpush.msra.mxu0 0.0
    %105 = vmatpush.msra.mxu0 0.0
    %106 = vmatpush.msra.mxu0 0.0
    %107 = vmatpush.msra.mxu0 0.0
    %108 = vmatpush.msra.mxu0 0.0
    %109 = vmatpush.msra.mxu0 0.0
    %110 = vmatpush.msra.mxu0 0.0
    %111 = vmatpush.msra.mxu0 %v64
    %112 = vmatpush.msra.mxu0 %v63
    %113 = vmatmul.f32.gmra.mxu0 %v95
    %v114 = vpop.f32.mrf.mxu0
    %v115 = vadd.f32 0.0, %v114
    %116 = vdwg.mxu0
    %v125 = vrot.slane %v45, 7
    %v126 = vsel %vm74, %v125, %v44
    %v127 = vrot.slane %v46, 6
    %v128 = vsel %vm77, %v127, %v126
    %v129 = vrot.slane %v47, 5
    %v130 = vsel %vm80, %v129, %v128
    %v131 = vrot.slane %v48, 4
    %v132 = vsel %vm83, %v131, %v130
    %v133 = vrot.slane %v49, 3
    %v134 = vsel %vm86, %v133, %v132
    %v135 = vrot.slane %v50, 2
    %v136 = vsel %vm89, %v135, %v134
    %v137 = vrot.slane %v51, 1
    %v138 = vsel %vm92, %v137, %v136
    %v139 = vsel %vm94, %v138, 0
    %141 = vmatpush.msra.mxu0 0.0
    %142 = vmatpush.msra.mxu0 0.0
    %143 = vmatpush.msra.mxu0 0.0
    %144 = vmatpush.msra.mxu0 0.0
    %145 = vmatpush.msra.mxu0 0.0
    %146 = vmatpush.msra.mxu0 0.0
    %147 = vmatpush.msra.mxu0 0.0
    %148 = vmatpush.msra.mxu0 0.0
    %149 = vmatpush.msra.mxu0 0.0
    %150 = vmatpush.msra.mxu0 0.0
    %151 = vmatpush.msra.mxu0 0.0
    %152 = vmatpush.msra.mxu0 0.0
    %153 = vmatpush.msra.mxu0 0.0
    %154 = vmatpush.msra.mxu0 0.0
    %155 = vmatpush.msra.mxu0 %v53
    %156 = vmatpush.msra.mxu0 %v52
    %157 = vmatmul.f32.gmra.mxu0 %v139
    %v158 = vpop.f32.mrf.mxu0
    %v159 = vadd.f32 %v115, %v158
    %160 = vdwg.mxu0
    %v161 = vld [vmem:[#allocation2 + $0x2] sm:$0x1]
    %v162 = vld [vmem:[#allocation2 + $0x12] sm:$0x1]
    %v163 = vld [vmem:[#allocation2 + $0x22] sm:$0x1]
    %v164 = vld [vmem:[#allocation2 + $0x32] sm:$0x1]
    %v165 = vld [vmem:[#allocation2 + $0x42] sm:$0x1]
    %v166 = vld [vmem:[#allocation2 + $0x52] sm:$0x1]
    %v167 = vld [vmem:[#allocation2 + $0x62] sm:$0x1]
    %v168 = vld [vmem:[#allocation2 + $0x72] sm:$0x1]
    %s169 = scalar_lea.vmem [#allocation5], 32
    %v170 = vld [vmem:[%s169] sm:$0xff]
    %v171 = vld [vmem:[%s169 + $0x8] sm:$0xff]
    %v180 = vrot.slane %v162, 7
    %v181 = vsel %vm74, %v180, %v161
    %v182 = vrot.slane %v163, 6
    %v183 = vsel %vm77, %v182, %v181
    %v184 = vrot.slane %v164, 5
    %v185 = vsel %vm80, %v184, %v183
    %v186 = vrot.slane %v165, 4
    %v187 = vsel %vm83, %v186, %v185
    %v188 = vrot.slane %v166, 3
    %v189 = vsel %vm86, %v188, %v187
    %v190 = vrot.slane %v167, 2
    %v191 = vsel %vm89, %v190, %v189
    %v192 = vrot.slane %v168, 1
    %v193 = vsel %vm92, %v192, %v191
    %v194 = vsel %vm94, %v193, 0
    %196 = vmatpush.msra.mxu0 0.0
    %197 = vmatpush.msra.mxu0 0.0
    %198 = vmatpush.msra.mxu0 0.0
    %199 = vmatpush.msra.mxu0 0.0
    %200 = vmatpush.msra.mxu0 0.0
    %201 = vmatpush.msra.mxu0 0.0
    %202 = vmatpush.msra.mxu0 0.0
    %203 = vmatpush.msra.mxu0 0.0
    %204 = vmatpush.msra.mxu0 0.0
    %205 = vmatpush.msra.mxu0 0.0
    %206 = vmatpush.msra.mxu0 0.0
    %207 = vmatpush.msra.mxu0 0.0
    %208 = vmatpush.msra.mxu0 0.0
    %209 = vmatpush.msra.mxu0 0.0
    %210 = vmatpush.msra.mxu0 %v171
    %211 = vmatpush.msra.mxu0 %v170
    %212 = vmatmul.f32.gmra.mxu0 %v194
    %v213 = vpop.f32.mrf.mxu0
    %v214 = vadd.f32 0.0, %v213
    %215 = vdwg.mxu0
    %v216 = vadd.f32 %v159, %v214
    %v217 = vld [vmem:[#allocation2 + $0x3] sm:$0x1]
    %v218 = vld [vmem:[#allocation2 + $0x13] sm:$0x1]
    %v219 = vld [vmem:[#allocation2 + $0x23] sm:$0x1]
    %v220 = vld [vmem:[#allocation2 + $0x33] sm:$0x1]
    %v221 = vld [vmem:[#allocation2 + $0x43] sm:$0x1]
    %v222 = vld [vmem:[#allocation2 + $0x53] sm:$0x1]
    %v223 = vld [vmem:[#allocation2 + $0x63] sm:$0x1]
    %v224 = vld [vmem:[#allocation2 + $0x73] sm:$0x1]
    %s225 = scalar_lea.vmem [#allocation5], 48
    %v226 = vld [vmem:[%s225] sm:$0xff]
    %v227 = vld [vmem:[%s225 + $0x8] sm:$0xff]
    %v236 = vrot.slane %v218, 7
    %v237 = vsel %vm74, %v236, %v217
    %v238 = vrot.slane %v219, 6
    %v239 = vsel %vm77, %v238, %v237
    %v240 = vrot.slane %v220, 5
    %v241 = vsel %vm80, %v240, %v239
    %v242 = vrot.slane %v221, 4
    %v243 = vsel %vm83, %v242, %v241
    %v244 = vrot.slane %v222, 3
    %v245 = vsel %vm86, %v244, %v243
    %v246 = vrot.slane %v223, 2
    %v247 = vsel %vm89, %v246, %v245
    %v248 = vrot.slane %v224, 1
    %v249 = vsel %vm92, %v248, %v247
    %v250 = vsel %vm94, %v249, 0
    %252 = vmatpush.msra.mxu0 0.0
    %253 = vmatpush.msra.mxu0 0.0
    %254 = vmatpush.msra.mxu0 0.0
    %255 = vmatpush.msra.mxu0 0.0
    %256 = vmatpush.msra.mxu0 0.0
    %257 = vmatpush.msra.mxu0 0.0
    %258 = vmatpush.msra.mxu0 0.0
    %259 = vmatpush.msra.mxu0 0.0
    %260 = vmatpush.msra.mxu0 0.0
    %261 = vmatpush.msra.mxu0 0.0
    %262 = vmatpush.msra.mxu0 0.0
    %263 = vmatpush.msra.mxu0 0.0
    %264 = vmatpush.msra.mxu0 0.0
    %265 = vmatpush.msra.mxu0 0.0
    %266 = vmatpush.msra.mxu0 %v227
    %267 = vmatpush.msra.mxu0 %v226
    %268 = vmatmul.f32.gmra.mxu0 %v250
    %v269 = vpop.f32.mrf.mxu0
    %v270 = vadd.f32 0.0, %v269
    %271 = vdwg.mxu0
    %v272 = vadd.f32 %v216, %v270
    %v273 = vld [vmem:[#allocation2 + $0x4] sm:$0x1]
    %v274 = vld [vmem:[#allocation2 + $0x14] sm:$0x1]
    %v275 = vld [vmem:[#allocation2 + $0x24] sm:$0x1]
    %v276 = vld [vmem:[#allocation2 + $0x34] sm:$0x1]
    %v277 = vld [vmem:[#allocation2 + $0x44] sm:$0x1]
    %v278 = vld [vmem:[#allocation2 + $0x54] sm:$0x1]
    %v279 = vld [vmem:[#allocation2 + $0x64] sm:$0x1]
    %v280 = vld [vmem:[#allocation2 + $0x74] sm:$0x1]
    %s281 = scalar_lea.vmem [#allocation5], 64
    %v282 = vld [vmem:[%s281] sm:$0xff]
    %v283 = vld [vmem:[%s281 + $0x8] sm:$0xff]
    %v292 = vrot.slane %v274, 7
    %v293 = vsel %vm74, %v292, %v273
    %v294 = vrot.slane %v275, 6
    %v295 = vsel %vm77, %v294, %v293
    %v296 = vrot.slane %v276, 5
    %v297 = vsel %vm80, %v296, %v295
    %v298 = vrot.slane %v277, 4
    %v299 = vsel %vm83, %v298, %v297
    %v300 = vrot.slane %v278, 3
    %v301 = vsel %vm86, %v300, %v299
    %v302 = vrot.slane %v279, 2
    %v303 = vsel %vm89, %v302, %v301
    %v304 = vrot.slane %v280, 1
    %v305 = vsel %vm92, %v304, %v303
    %v306 = vsel %vm94, %v305, 0
    %308 = vmatpush.msra.mxu0 0.0
    %309 = vmatpush.msra.mxu0 0.0
    %310 = vmatpush.msra.mxu0 0.0
    %311 = vmatpush.msra.mxu0 0.0
    %312 = vmatpush.msra.mxu0 0.0
    %313 = vmatpush.msra.mxu0 0.0
    %314 = vmatpush.msra.mxu0 0.0
    %315 = vmatpush.msra.mxu0 0.0
    %316 = vmatpush.msra.mxu0 0.0
    %317 = vmatpush.msra.mxu0 0.0
    %318 = vmatpush.msra.mxu0 0.0
    %319 = vmatpush.msra.mxu0 0.0
    %320 = vmatpush.msra.mxu0 0.0
    %321 = vmatpush.msra.mxu0 0.0
    %322 = vmatpush.msra.mxu0 %v283
    %323 = vmatpush.msra.mxu0 %v282
    %324 = vmatmul.f32.gmra.mxu0 %v306
    %v325 = vpop.f32.mrf.mxu0
    %v326 = vadd.f32 0.0, %v325
    %327 = vdwg.mxu0
    %v328 = vadd.f32 %v272, %v326
    %v329 = vld [vmem:[#allocation2 + $0x5] sm:$0x1]
    %v330 = vld [vmem:[#allocation2 + $0x15] sm:$0x1]
    %v331 = vld [vmem:[#allocation2 + $0x25] sm:$0x1]
    %v332 = vld [vmem:[#allocation2 + $0x35] sm:$0x1]
    %v333 = vld [vmem:[#allocation2 + $0x45] sm:$0x1]
    %v334 = vld [vmem:[#allocation2 + $0x55] sm:$0x1]
    %v335 = vld [vmem:[#allocation2 + $0x65] sm:$0x1]
    %v336 = vld [vmem:[#allocation2 + $0x75] sm:$0x1]
    %s337 = scalar_lea.vmem [#allocation5], 80
    %v338 = vld [vmem:[%s337] sm:$0xff]
    %v339 = vld [vmem:[%s337 + $0x8] sm:$0xff]
    %v348 = vrot.slane %v330, 7
    %v349 = vsel %vm74, %v348, %v329
    %v350 = vrot.slane %v331, 6
    %v351 = vsel %vm77, %v350, %v349
    %v352 = vrot.slane %v332, 5
    %v353 = vsel %vm80, %v352, %v351
    %v354 = vrot.slane %v333, 4
    %v355 = vsel %vm83, %v354, %v353
    %v356 = vrot.slane %v334, 3
    %v357 = vsel %vm86, %v356, %v355
    %v358 = vrot.slane %v335, 2
    %v359 = vsel %vm89, %v358, %v357
    %v360 = vrot.slane %v336, 1
    %v361 = vsel %vm92, %v360, %v359
    %v362 = vsel %vm94, %v361, 0
    %364 = vmatpush.msra.mxu0 0.0
    %365 = vmatpush.msra.mxu0 0.0
    %366 = vmatpush.msra.mxu0 0.0
    %367 = vmatpush.msra.mxu0 0.0
    %368 = vmatpush.msra.mxu0 0.0
    %369 = vmatpush.msra.mxu0 0.0
    %370 = vmatpush.msra.mxu0 0.0
    %371 = vmatpush.msra.mxu0 0.0
    %372 = vmatpush.msra.mxu0 0.0
    %373 = vmatpush.msra.mxu0 0.0
    %374 = vmatpush.msra.mxu0 0.0
    %375 = vmatpush.msra.mxu0 0.0
    %376 = vmatpush.msra.mxu0 0.0
    %377 = vmatpush.msra.mxu0 0.0
    %378 = vmatpush.msra.mxu0 %v339
    %379 = vmatpush.msra.mxu0 %v338
    %380 = vmatmul.f32.gmra.mxu0 %v362
    %v381 = vpop.f32.mrf.mxu0
    %v382 = vadd.f32 0.0, %v381
    %383 = vdwg.mxu0
    %v384 = vadd.f32 %v328, %v382
    %v385 = vld [vmem:[#allocation2 + $0x6] sm:$0x1]
    %v386 = vld [vmem:[#allocation2 + $0x16] sm:$0x1]
    %v387 = vld [vmem:[#allocation2 + $0x26] sm:$0x1]
    %v388 = vld [vmem:[#allocation2 + $0x36] sm:$0x1]
    %v389 = vld [vmem:[#allocation2 + $0x46] sm:$0x1]
    %v390 = vld [vmem:[#allocation2 + $0x56] sm:$0x1]
    %v391 = vld [vmem:[#allocation2 + $0x66] sm:$0x1]
    %v392 = vld [vmem:[#allocation2 + $0x76] sm:$0x1]
    %s393 = scalar_lea.vmem [#allocation5], 96
    %v394 = vld [vmem:[%s393] sm:$0xff]
    %v395 = vld [vmem:[%s393 + $0x8] sm:$0xff]
    %v404 = vrot.slane %v386, 7
    %v405 = vsel %vm74, %v404, %v385
    %v406 = vrot.slane %v387, 6
    %v407 = vsel %vm77, %v406, %v405
    %v408 = vrot.slane %v388, 5
    %v409 = vsel %vm80, %v408, %v407
    %v410 = vrot.slane %v389, 4
    %v411 = vsel %vm83, %v410, %v409
    %v412 = vrot.slane %v390, 3
    %v413 = vsel %vm86, %v412, %v411
    %v414 = vrot.slane %v391, 2
    %v415 = vsel %vm89, %v414, %v413
    %v416 = vrot.slane %v392, 1
    %v417 = vsel %vm92, %v416, %v415
    %v418 = vsel %vm94, %v417, 0
    %420 = vmatpush.msra.mxu0 0.0
    %421 = vmatpush.msra.mxu0 0.0
    %422 = vmatpush.msra.mxu0 0.0
    %423 = vmatpush.msra.mxu0 0.0
    %424 = vmatpush.msra.mxu0 0.0
    %425 = vmatpush.msra.mxu0 0.0
    %426 = vmatpush.msra.mxu0 0.0
    %427 = vmatpush.msra.mxu0 0.0
    %428 = vmatpush.msra.mxu0 0.0
    %429 = vmatpush.msra.mxu0 0.0
    %430 = vmatpush.msra.mxu0 0.0
    %431 = vmatpush.msra.mxu0 0.0
    %432 = vmatpush.msra.mxu0 0.0
    %433 = vmatpush.msra.mxu0 0.0
    %434 = vmatpush.msra.mxu0 %v395
    %435 = vmatpush.msra.mxu0 %v394
    %436 = vmatmul.f32.gmra.mxu0 %v418
    %v437 = vpop.f32.mrf.mxu0
    %v438 = vadd.f32 0.0, %v437
    %439 = vdwg.mxu0
    %v440 = vadd.f32 %v384, %v438
    %v441 = vld [vmem:[#allocation2 + $0x7] sm:$0x1]
    %v442 = vld [vmem:[#allocation2 + $0x17] sm:$0x1]
    %v443 = vld [vmem:[#allocation2 + $0x27] sm:$0x1]
    %v444 = vld [vmem:[#allocation2 + $0x37] sm:$0x1]
    %v445 = vld [vmem:[#allocation2 + $0x47] sm:$0x1]
    %v446 = vld [vmem:[#allocation2 + $0x57] sm:$0x1]
    %v447 = vld [vmem:[#allocation2 + $0x67] sm:$0x1]
    %v448 = vld [vmem:[#allocation2 + $0x77] sm:$0x1]
    %s449 = scalar_lea.vmem [#allocation5], 112
    %v450 = vld [vmem:[%s449] sm:$0xff]
    %v451 = vld [vmem:[%s449 + $0x8] sm:$0xff]
    %v460 = vrot.slane %v442, 7
    %v461 = vsel %vm74, %v460, %v441
    %v462 = vrot.slane %v443, 6
    %v463 = vsel %vm77, %v462, %v461
    %v464 = vrot.slane %v444, 5
    %v465 = vsel %vm80, %v464, %v463
    %v466 = vrot.slane %v445, 4
    %v467 = vsel %vm83, %v466, %v465
    %v468 = vrot.slane %v446, 3
    %v469 = vsel %vm86, %v468, %v467
    %v470 = vrot.slane %v447, 2
    %v471 = vsel %vm89, %v470, %v469
    %v472 = vrot.slane %v448, 1
    %v473 = vsel %vm92, %v472, %v471
    %v474 = vsel %vm94, %v473, 0
    %476 = vmatpush.msra.mxu0 0.0
    %477 = vmatpush.msra.mxu0 0.0
    %478 = vmatpush.msra.mxu0 0.0
    %479 = vmatpush.msra.mxu0 0.0
    %480 = vmatpush.msra.mxu0 0.0
    %481 = vmatpush.msra.mxu0 0.0
    %482 = vmatpush.msra.mxu0 0.0
    %483 = vmatpush.msra.mxu0 0.0
    %484 = vmatpush.msra.mxu0 0.0
    %485 = vmatpush.msra.mxu0 0.0
    %486 = vmatpush.msra.mxu0 0.0
    %487 = vmatpush.msra.mxu0 0.0
    %488 = vmatpush.msra.mxu0 0.0
    %489 = vmatpush.msra.mxu0 0.0
    %490 = vmatpush.msra.mxu0 %v451
    %491 = vmatpush.msra.mxu0 %v450
    %492 = vmatmul.f32.gmra.mxu0 %v474
    %v493 = vpop.f32.mrf.mxu0
    %v494 = vadd.f32 0.0, %v493
    %495 = vdwg.mxu0
    %v496 = vadd.f32 %v440, %v494
    %v497 = vld [vmem:[#allocation2 + $0x8] sm:$0x1]
    %v498 = vld [vmem:[#allocation2 + $0x18] sm:$0x1]
    %v499 = vld [vmem:[#allocation2 + $0x28] sm:$0x1]
    %v500 = vld [vmem:[#allocation2 + $0x38] sm:$0x1]
    %v501 = vld [vmem:[#allocation2 + $0x48] sm:$0x1]
    %v502 = vld [vmem:[#allocation2 + $0x58] sm:$0x1]
    %v503 = vld [vmem:[#allocation2 + $0x68] sm:$0x1]
    %v504 = vld [vmem:[#allocation2 + $0x78] sm:$0x1]
    %s505 = scalar_lea.vmem [#allocation5], 128
    %v506 = vld [vmem:[%s505] sm:$0xff]
    %v507 = vld [vmem:[%s505 + $0x8] sm:$0xff]
    %v516 = vrot.slane %v498, 7
    %v517 = vsel %vm74, %v516, %v497
    %v518 = vrot.slane %v499, 6
    %v519 = vsel %vm77, %v518, %v517
    %v520 = vrot.slane %v500, 5
    %v521 = vsel %vm80, %v520, %v519
    %v522 = vrot.slane %v501, 4
    %v523 = vsel %vm83, %v522, %v521
    %v524 = vrot.slane %v502, 3
    %v525 = vsel %vm86, %v524, %v523
    %v526 = vrot.slane %v503, 2
    %v527 = vsel %vm89, %v526, %v525
    %v528 = vrot.slane %v504, 1
    %v529 = vsel %vm92, %v528, %v527
    %v530 = vsel %vm94, %v529, 0
    %532 = vmatpush.msra.mxu0 0.0
    %533 = vmatpush.msra.mxu0 0.0
    %534 = vmatpush.msra.mxu0 0.0
    %535 = vmatpush.msra.mxu0 0.0
    %536 = vmatpush.msra.mxu0 0.0
    %537 = vmatpush.msra.mxu0 0.0
    %538 = vmatpush.msra.mxu0 0.0
    %539 = vmatpush.msra.mxu0 0.0
    %540 = vmatpush.msra.mxu0 0.0
    %541 = vmatpush.msra.mxu0 0.0
    %542 = vmatpush.msra.mxu0 0.0
    %543 = vmatpush.msra.mxu0 0.0
    %544 = vmatpush.msra.mxu0 0.0
    %545 = vmatpush.msra.mxu0 0.0
    %546 = vmatpush.msra.mxu0 %v507
    %547 = vmatpush.msra.mxu0 %v506
    %548 = vmatmul.f32.gmra.mxu0 %v530
    %v549 = vpop.f32.mrf.mxu0
    %v550 = vadd.f32 0.0, %v549
    %551 = vdwg.mxu0
    %v552 = vadd.f32 %v496, %v550
    %v553 = vld [vmem:[#allocation2 + $0x9] sm:$0x1]
    %v554 = vld [vmem:[#allocation2 + $0x19] sm:$0x1]
    %v555 = vld [vmem:[#allocation2 + $0x29] sm:$0x1]
    %v556 = vld [vmem:[#allocation2 + $0x39] sm:$0x1]
    %v557 = vld [vmem:[#allocation2 + $0x49] sm:$0x1]
    %v558 = vld [vmem:[#allocation2 + $0x59] sm:$0x1]
    %v559 = vld [vmem:[#allocation2 + $0x69] sm:$0x1]
    %v560 = vld [vmem:[#allocation2 + $0x79] sm:$0x1]
    %s561 = scalar_lea.vmem [#allocation5], 144
    %v562 = vld [vmem:[%s561] sm:$0xff]
    %v563 = vld [vmem:[%s561 + $0x8] sm:$0xff]
    %v572 = vrot.slane %v554, 7
    %v573 = vsel %vm74, %v572, %v553
    %v574 = vrot.slane %v555, 6
    %v575 = vsel %vm77, %v574, %v573
    %v576 = vrot.slane %v556, 5
    %v577 = vsel %vm80, %v576, %v575
    %v578 = vrot.slane %v557, 4
    %v579 = vsel %vm83, %v578, %v577
    %v580 = vrot.slane %v558, 3
    %v581 = vsel %vm86, %v580, %v579
    %v582 = vrot.slane %v559, 2
    %v583 = vsel %vm89, %v582, %v581
    %v584 = vrot.slane %v560, 1
    %v585 = vsel %vm92, %v584, %v583
    %v586 = vsel %vm94, %v585, 0
    %588 = vmatpush.msra.mxu0 0.0
    %589 = vmatpush.msra.mxu0 0.0
    %590 = vmatpush.msra.mxu0 0.0
    %591 = vmatpush.msra.mxu0 0.0
    %592 = vmatpush.msra.mxu0 0.0
    %593 = vmatpush.msra.mxu0 0.0
    %594 = vmatpush.msra.mxu0 0.0
    %595 = vmatpush.msra.mxu0 0.0
    %596 = vmatpush.msra.mxu0 0.0
    %597 = vmatpush.msra.mxu0 0.0
    %598 = vmatpush.msra.mxu0 0.0
    %599 = vmatpush.msra.mxu0 0.0
    %600 = vmatpush.msra.mxu0 0.0
    %601 = vmatpush.msra.mxu0 0.0
    %602 = vmatpush.msra.mxu0 %v563
    %603 = vmatpush.msra.mxu0 %v562
    %604 = vmatmul.f32.gmra.mxu0 %v586
    %v605 = vpop.f32.mrf.mxu0
    %v606 = vadd.f32 0.0, %v605
    %607 = vdwg.mxu0
    %v608 = vadd.f32 %v552, %v606
    %v609 = vld [vmem:[#allocation2 + $0xa] sm:$0x1]
    %v610 = vld [vmem:[#allocation2 + $0x1a] sm:$0x1]
    %v611 = vld [vmem:[#allocation2 + $0x2a] sm:$0x1]
    %v612 = vld [vmem:[#allocation2 + $0x3a] sm:$0x1]
    %v613 = vld [vmem:[#allocation2 + $0x4a] sm:$0x1]
    %v614 = vld [vmem:[#allocation2 + $0x5a] sm:$0x1]
    %v615 = vld [vmem:[#allocation2 + $0x6a] sm:$0x1]
    %v616 = vld [vmem:[#allocation2 + $0x7a] sm:$0x1]
    %s617 = scalar_lea.vmem [#allocation5], 160
    %v618 = vld [vmem:[%s617] sm:$0xff]
    %v619 = vld [vmem:[%s617 + $0x8] sm:$0xff]
    %v628 = vrot.slane %v610, 7
    %v629 = vsel %vm74, %v628, %v609
    %v630 = vrot.slane %v611, 6
    %v631 = vsel %vm77, %v630, %v629
    %v632 = vrot.slane %v612, 5
    %v633 = vsel %vm80, %v632, %v631
    %v634 = vrot.slane %v613, 4
    %v635 = vsel %vm83, %v634, %v633
    %v636 = vrot.slane %v614, 3
    %v637 = vsel %vm86, %v636, %v635
    %v638 = vrot.slane %v615, 2
    %v639 = vsel %vm89, %v638, %v637
    %v640 = vrot.slane %v616, 1
    %v641 = vsel %vm92, %v640, %v639
    %v642 = vsel %vm94, %v641, 0
    %644 = vmatpush.msra.mxu0 0.0
    %645 = vmatpush.msra.mxu0 0.0
    %646 = vmatpush.msra.mxu0 0.0
    %647 = vmatpush.msra.mxu0 0.0
    %648 = vmatpush.msra.mxu0 0.0
    %649 = vmatpush.msra.mxu0 0.0
    %650 = vmatpush.msra.mxu0 0.0
    %651 = vmatpush.msra.mxu0 0.0
    %652 = vmatpush.msra.mxu0 0.0
    %653 = vmatpush.msra.mxu0 0.0
    %654 = vmatpush.msra.mxu0 0.0
    %655 = vmatpush.msra.mxu0 0.0
    %656 = vmatpush.msra.mxu0 0.0
    %657 = vmatpush.msra.mxu0 0.0
    %658 = vmatpush.msra.mxu0 %v619
    %659 = vmatpush.msra.mxu0 %v618
    %660 = vmatmul.f32.gmra.mxu0 %v642
    %v661 = vpop.f32.mrf.mxu0
    %v662 = vadd.f32 0.0, %v661
    %663 = vdwg.mxu0
    %v664 = vadd.f32 %v608, %v662
    %v665 = vld [vmem:[#allocation2 + $0xb] sm:$0x1]
    %v666 = vld [vmem:[#allocation2 + $0x1b] sm:$0x1]
    %v667 = vld [vmem:[#allocation2 + $0x2b] sm:$0x1]
    %v668 = vld [vmem:[#allocation2 + $0x3b] sm:$0x1]
    %v669 = vld [vmem:[#allocation2 + $0x4b] sm:$0x1]
    %v670 = vld [vmem:[#allocation2 + $0x5b] sm:$0x1]
    %v671 = vld [vmem:[#allocation2 + $0x6b] sm:$0x1]
    %v672 = vld [vmem:[#allocation2 + $0x7b] sm:$0x1]
    %s673 = scalar_lea.vmem [#allocation5], 176
    %v674 = vld [vmem:[%s673] sm:$0xff]
    %v675 = vld [vmem:[%s673 + $0x8] sm:$0xff]
    %v684 = vrot.slane %v666, 7
    %v685 = vsel %vm74, %v684, %v665
    %v686 = vrot.slane %v667, 6
    %v687 = vsel %vm77, %v686, %v685
    %v688 = vrot.slane %v668, 5
    %v689 = vsel %vm80, %v688, %v687
    %v690 = vrot.slane %v669, 4
    %v691 = vsel %vm83, %v690, %v689
    %v692 = vrot.slane %v670, 3
    %v693 = vsel %vm86, %v692, %v691
    %v694 = vrot.slane %v671, 2
    %v695 = vsel %vm89, %v694, %v693
    %v696 = vrot.slane %v672, 1
    %v697 = vsel %vm92, %v696, %v695
    %v698 = vsel %vm94, %v697, 0
    %700 = vmatpush.msra.mxu0 0.0
    %701 = vmatpush.msra.mxu0 0.0
    %702 = vmatpush.msra.mxu0 0.0
    %703 = vmatpush.msra.mxu0 0.0
    %704 = vmatpush.msra.mxu0 0.0
    %705 = vmatpush.msra.mxu0 0.0
    %706 = vmatpush.msra.mxu0 0.0
    %707 = vmatpush.msra.mxu0 0.0
    %708 = vmatpush.msra.mxu0 0.0
    %709 = vmatpush.msra.mxu0 0.0
    %710 = vmatpush.msra.mxu0 0.0
    %711 = vmatpush.msra.mxu0 0.0
    %712 = vmatpush.msra.mxu0 0.0
    %713 = vmatpush.msra.mxu0 0.0
    %714 = vmatpush.msra.mxu0 %v675
    %715 = vmatpush.msra.mxu0 %v674
    %716 = vmatmul.f32.gmra.mxu0 %v698
    %v717 = vpop.f32.mrf.mxu0
    %v718 = vadd.f32 0.0, %v717
    %719 = vdwg.mxu0
    %v720 = vadd.f32 %v664, %v718
    %v721 = vld [vmem:[#allocation2 + $0xc] sm:$0x1]
    %v722 = vld [vmem:[#allocation2 + $0x1c] sm:$0x1]
    %v723 = vld [vmem:[#allocation2 + $0x2c] sm:$0x1]
    %v724 = vld [vmem:[#allocation2 + $0x3c] sm:$0x1]
    %v725 = vld [vmem:[#allocation2 + $0x4c] sm:$0x1]
    %v726 = vld [vmem:[#allocation2 + $0x5c] sm:$0x1]
    %v727 = vld [vmem:[#allocation2 + $0x6c] sm:$0x1]
    %v728 = vld [vmem:[#allocation2 + $0x7c] sm:$0x1]
    %s729 = scalar_lea.vmem [#allocation5], 192
    %v730 = vld [vmem:[%s729] sm:$0xff]
    %v731 = vld [vmem:[%s729 + $0x8] sm:$0xff]
    %v740 = vrot.slane %v722, 7
    %v741 = vsel %vm74, %v740, %v721
    %v742 = vrot.slane %v723, 6
    %v743 = vsel %vm77, %v742, %v741
    %v744 = vrot.slane %v724, 5
    %v745 = vsel %vm80, %v744, %v743
    %v746 = vrot.slane %v725, 4
    %v747 = vsel %vm83, %v746, %v745
    %v748 = vrot.slane %v726, 3
    %v749 = vsel %vm86, %v748, %v747
    %v750 = vrot.slane %v727, 2
    %v751 = vsel %vm89, %v750, %v749
    %v752 = vrot.slane %v728, 1
    %v753 = vsel %vm92, %v752, %v751
    %v754 = vsel %vm94, %v753, 0
    %756 = vmatpush.msra.mxu0 0.0
    %757 = vmatpush.msra.mxu0 0.0
    %758 = vmatpush.msra.mxu0 0.0
    %759 = vmatpush.msra.mxu0 0.0
    %760 = vmatpush.msra.mxu0 0.0
    %761 = vmatpush.msra.mxu0 0.0
    %762 = vmatpush.msra.mxu0 0.0
    %763 = vmatpush.msra.mxu0 0.0
    %764 = vmatpush.msra.mxu0 0.0
    %765 = vmatpush.msra.mxu0 0.0
    %766 = vmatpush.msra.mxu0 0.0
    %767 = vmatpush.msra.mxu0 0.0
    %768 = vmatpush.msra.mxu0 0.0
    %769 = vmatpush.msra.mxu0 0.0
    %770 = vmatpush.msra.mxu0 %v731
    %771 = vmatpush.msra.mxu0 %v730
    %772 = vmatmul.f32.gmra.mxu0 %v754
    %v773 = vpop.f32.mrf.mxu0
    %v774 = vadd.f32 0.0, %v773
    %775 = vdwg.mxu0
    %v776 = vadd.f32 %v720, %v774
    %v777 = vld [vmem:[#allocation2 + $0xd] sm:$0x1]
    %v778 = vld [vmem:[#allocation2 + $0x1d] sm:$0x1]
    %v779 = vld [vmem:[#allocation2 + $0x2d] sm:$0x1]
    %v780 = vld [vmem:[#allocation2 + $0x3d] sm:$0x1]
    %v781 = vld [vmem:[#allocation2 + $0x4d] sm:$0x1]
    %v782 = vld [vmem:[#allocation2 + $0x5d] sm:$0x1]
    %v783 = vld [vmem:[#allocation2 + $0x6d] sm:$0x1]
    %v784 = vld [vmem:[#allocation2 + $0x7d] sm:$0x1]
    %s785 = scalar_lea.vmem [#allocation5], 208
    %v786 = vld [vmem:[%s785] sm:$0xff]
    %v787 = vld [vmem:[%s785 + $0x8] sm:$0xff]
    %v796 = vrot.slane %v778, 7
    %v797 = vsel %vm74, %v796, %v777
    %v798 = vrot.slane %v779, 6
    %v799 = vsel %vm77, %v798, %v797
    %v800 = vrot.slane %v780, 5
    %v801 = vsel %vm80, %v800, %v799
    %v802 = vrot.slane %v781, 4
    %v803 = vsel %vm83, %v802, %v801
    %v804 = vrot.slane %v782, 3
    %v805 = vsel %vm86, %v804, %v803
    %v806 = vrot.slane %v783, 2
    %v807 = vsel %vm89, %v806, %v805
    %v808 = vrot.slane %v784, 1
    %v809 = vsel %vm92, %v808, %v807
    %v810 = vsel %vm94, %v809, 0
    %812 = vmatpush.msra.mxu0 0.0
    %813 = vmatpush.msra.mxu0 0.0
    %814 = vmatpush.msra.mxu0 0.0
    %815 = vmatpush.msra.mxu0 0.0
    %816 = vmatpush.msra.mxu0 0.0
    %817 = vmatpush.msra.mxu0 0.0
    %818 = vmatpush.msra.mxu0 0.0
    %819 = vmatpush.msra.mxu0 0.0
    %820 = vmatpush.msra.mxu0 0.0
    %821 = vmatpush.msra.mxu0 0.0
    %822 = vmatpush.msra.mxu0 0.0
    %823 = vmatpush.msra.mxu0 0.0
    %824 = vmatpush.msra.mxu0 0.0
    %825 = vmatpush.msra.mxu0 0.0
    %826 = vmatpush.msra.mxu0 %v787
    %827 = vmatpush.msra.mxu0 %v786
    %828 = vmatmul.f32.gmra.mxu0 %v810
    %v829 = vpop.f32.mrf.mxu0
    %v830 = vadd.f32 0.0, %v829
    %831 = vdwg.mxu0
    %v832 = vadd.f32 %v776, %v830
    %v833 = vld [vmem:[#allocation2 + $0xe] sm:$0x1]
    %v834 = vld [vmem:[#allocation2 + $0x1e] sm:$0x1]
    %v835 = vld [vmem:[#allocation2 + $0x2e] sm:$0x1]
    %v836 = vld [vmem:[#allocation2 + $0x3e] sm:$0x1]
    %v837 = vld [vmem:[#allocation2 + $0x4e] sm:$0x1]
    %v838 = vld [vmem:[#allocation2 + $0x5e] sm:$0x1]
    %v839 = vld [vmem:[#allocation2 + $0x6e] sm:$0x1]
    %v840 = vld [vmem:[#allocation2 + $0x7e] sm:$0x1]
    %s841 = scalar_lea.vmem [#allocation5], 224
    %v842 = vld [vmem:[%s841] sm:$0xff]
    %v843 = vld [vmem:[%s841 + $0x8] sm:$0xff]
    %v852 = vrot.slane %v834, 7
    %v853 = vsel %vm74, %v852, %v833
    %v854 = vrot.slane %v835, 6
    %v855 = vsel %vm77, %v854, %v853
    %v856 = vrot.slane %v836, 5
    %v857 = vsel %vm80, %v856, %v855
    %v858 = vrot.slane %v837, 4
    %v859 = vsel %vm83, %v858, %v857
    %v860 = vrot.slane %v838, 3
    %v861 = vsel %vm86, %v860, %v859
    %v862 = vrot.slane %v839, 2
    %v863 = vsel %vm89, %v862, %v861
    %v864 = vrot.slane %v840, 1
    %v865 = vsel %vm92, %v864, %v863
    %v866 = vsel %vm94, %v865, 0
    %868 = vmatpush.msra.mxu0 0.0
    %869 = vmatpush.msra.mxu0 0.0
    %870 = vmatpush.msra.mxu0 0.0
    %871 = vmatpush.msra.mxu0 0.0
    %872 = vmatpush.msra.mxu0 0.0
    %873 = vmatpush.msra.mxu0 0.0
    %874 = vmatpush.msra.mxu0 0.0
    %875 = vmatpush.msra.mxu0 0.0
    %876 = vmatpush.msra.mxu0 0.0
    %877 = vmatpush.msra.mxu0 0.0
    %878 = vmatpush.msra.mxu0 0.0
    %879 = vmatpush.msra.mxu0 0.0
    %880 = vmatpush.msra.mxu0 0.0
    %881 = vmatpush.msra.mxu0 0.0
    %882 = vmatpush.msra.mxu0 %v843
    %883 = vmatpush.msra.mxu0 %v842
    %884 = vmatmul.f32.gmra.mxu0 %v866
    %v885 = vpop.f32.mrf.mxu0
    %v886 = vadd.f32 0.0, %v885
    %887 = vdwg.mxu0
    %v888 = vadd.f32 %v832, %v886
    %v889 = vld [vmem:[#allocation2 + $0xf] sm:$0x1]
    %v890 = vld [vmem:[#allocation2 + $0x1f] sm:$0x1]
    %v891 = vld [vmem:[#allocation2 + $0x2f] sm:$0x1]
    %v892 = vld [vmem:[#allocation2 + $0x3f] sm:$0x1]
    %v893 = vld [vmem:[#allocation2 + $0x4f] sm:$0x1]
    %v894 = vld [vmem:[#allocation2 + $0x5f] sm:$0x1]
    %v895 = vld [vmem:[#allocation2 + $0x6f] sm:$0x1]
    %v896 = vld [vmem:[#allocation2 + $0x7f] sm:$0x1]
    %s897 = scalar_lea.vmem [#allocation5], 240
    %v898 = vld [vmem:[%s897] sm:$0xff]
    %v899 = vld [vmem:[%s897 + $0x8] sm:$0xff]
    %v908 = vrot.slane %v890, 7
    %v909 = vsel %vm74, %v908, %v889
    %v910 = vrot.slane %v891, 6
    %v911 = vsel %vm77, %v910, %v909
    %v912 = vrot.slane %v892, 5
    %v913 = vsel %vm80, %v912, %v911
    %v914 = vrot.slane %v893, 4
    %v915 = vsel %vm83, %v914, %v913
    %v916 = vrot.slane %v894, 3
    %v917 = vsel %vm86, %v916, %v915
    %v918 = vrot.slane %v895, 2
    %v919 = vsel %vm89, %v918, %v917
    %v920 = vrot.slane %v896, 1
    %v921 = vsel %vm92, %v920, %v919
    %v922 = vsel %vm94, %v921, 0
    %924 = vmatpush.msra.mxu0 0.0
    %925 = vmatpush.msra.mxu0 0.0
    %926 = vmatpush.msra.mxu0 0.0
    %927 = vmatpush.msra.mxu0 0.0
    %928 = vmatpush.msra.mxu0 0.0
    %929 = vmatpush.msra.mxu0 0.0
    %930 = vmatpush.msra.mxu0 0.0
    %931 = vmatpush.msra.mxu0 0.0
    %932 = vmatpush.msra.mxu0 0.0
    %933 = vmatpush.msra.mxu0 0.0
    %934 = vmatpush.msra.mxu0 0.0
    %935 = vmatpush.msra.mxu0 0.0
    %936 = vmatpush.msra.mxu0 0.0
    %937 = vmatpush.msra.mxu0 0.0
    %938 = vmatpush.msra.mxu0 %v899
    %939 = vmatpush.msra.mxu0 %v898
    %940 = vmatmul.f32.gmra.mxu0 %v922
    %v941 = vpop.f32.mrf.mxu0
    %v942 = vadd.f32 0.0, %v941
    %943 = vdwg.mxu0
    %v944 = vadd.f32 %v888, %v942
    %945 = vst [vmem:[#allocation7] sm:$0xff] %v944
    // Predicated region
    $region18: #{psp_module.1} parent=1 // pred_check
      _
    $region19: #{psp_module.1} parent=1 // pred_check_branch
      %947 = sbr.rel (0) target = $region21
    $region20: #{psp_module.1} parent=1 // pred_region
      %949 = vsyncadd [#allocation4], 0
      %s951 = sshll.u32 [#allocation7], 4
      %s952 = int_to_ptr.vmem [resolvable:$true] %s951
      %s953 = sshll.u32 %s2, 4
      %s954 = int_to_ptr.hbm [resolvable:$true] %s953
      %956 = dma.vmem_to_hbm [thread:$0]  %s952, 128, %s954, [#allocation4]
    $region21: #{psp_module.1} parent=1 // pred_fallthru
      _
    // Predicated region
    $region22: #{psp_module.1} parent=1 // pred_check
      _
    $region23: #{psp_module.1} parent=1 // pred_check_branch
      %958 = sbr.rel (0) target = $region25
    $region24: #{psp_module.1} parent=1 // pred_region
      %960 = dma.done [#allocation4], 128
    $region25: #{psp_module.1} parent=1 // pred_fallthru
      _
    %961 = vsyncpa [#allocation3], 1
    %962 = vsyncpa [#allocation6], 1
    %963 = vsyncpa [#allocation4], 1

</llo_original>
